<compile_context>
chip_gen: v7x
topology: tpu7x:2x2x1
jax: 0.10.0
libtpu: 0.0.40
codegen_flags: <defaults>
</compile_context>

<pallas_src>
import jax
import jax.numpy as jnp
from jax.experimental import pallas as pl
from jax.experimental.pallas import tpu as pltpu


def _round_up(x, m):
    return (x + m - 1) // m * m


def _gather_block_kernel(labels_ref, table_ref, out_ref):
    # labels_ref: (n_pad,) int32 in SMEM (scalar prefetch).
    # table_ref:  (rows_pad, hidden_pad) full embedding table, VMEM-resident.
    # out_ref:    (block_n, hidden_pad) output block for this grid step.
    i = pl.program_id(0)
    block_n = out_ref.shape[0]

    def body(j, carry):
        lbl = labels_ref[i * block_n + j]
        out_ref[pl.ds(j, 1), :] = table_ref[pl.ds(lbl, 1), :]
        return carry

    jax.lax.fori_loop(0, block_n, body, 0, unroll=True)


def _apply_token_drop(labels, num_classes, dropout_prob, train, rng,
                      force_drop_ids):
    """Mirrors LabelEmbedder.token_drop / the forward() gating logic."""
    use_dropout = dropout_prob > 0
    if (train and use_dropout) or (force_drop_ids is not None):
        if force_drop_ids is None:
            if rng is None:
                raise ValueError(
                    "rng must be provided when train=True and dropout_prob>0")
            drop_ids = jax.random.uniform(rng, labels.shape) < dropout_prob
        else:
            drop_ids = force_drop_ids == 1
        labels = jnp.where(drop_ids, num_classes, labels)
    return labels


def label_embedder(labels, embedding_table, *, num_classes, dropout_prob,
                   train, rng=None, force_drop_ids=None):
    """Pallas forward pass of LabelEmbedder.

    labels:           (N,) integer class ids.
    embedding_table:  (num_classes + use_cfg_embedding, H) float table,
                      i.e. nn.Embedding.weight.
    """
    labels = labels.astype(jnp.int32)

    dropping = (train and dropout_prob > 0) or (force_drop_ids is not None)
    if dropping and embedding_table.shape[0] < num_classes + 1:
        raise ValueError(
            "label dropout requested but embedding_table has no CFG null row "
            f"(needs >= {num_classes + 1} rows, got {embedding_table.shape[0]})")

    labels = _apply_token_drop(labels, num_classes, dropout_prob, train, rng,
                               force_drop_ids)

    n = labels.shape[0]
    rows, hidden = embedding_table.shape

    # Block the batch axis; pad everything to TPU-friendly shapes.
    block_n = min(32, _round_up(max(n, 1), 8))
    n_pad = _round_up(n, block_n)
    rows_pad = _round_up(rows, 8)        # sublane-aligned table
    hidden_pad = _round_up(hidden, 128)  # lane-dense stores

    table_p = embedding_table
    if (rows_pad, hidden_pad) != (rows, hidden):
        table_p = jnp.pad(embedding_table,
                          ((0, rows_pad - rows), (0, hidden_pad - hidden)))
    labels_p = jnp.pad(labels, (0, n_pad - n))  # pad labels index row 0 (valid)

    grid = (n_pad // block_n,)
    grid_spec = pltpu.PrefetchScalarGridSpec(
        num_scalar_prefetch=1,
        grid=grid,
        in_specs=[
            # Whole table, same block every step -> stays resident in VMEM.
            pl.BlockSpec((rows_pad, hidden_pad), lambda i, lbl: (0, 0)),
        ],
        out_specs=pl.BlockSpec((block_n, hidden_pad), lambda i, lbl: (i, 0)),
    )

    elt = embedding_table.dtype.itemsize
    cost = pl.CostEstimate(
        flops=0,
        transcendentals=0,
        bytes_accessed=rows_pad * hidden_pad * elt
        + n_pad * hidden_pad * elt
        + n_pad * 4,
    )

    out = pl.pallas_call(
        _gather_block_kernel,
        out_shape=jax.ShapeDtypeStruct((n_pad, hidden_pad),
                                       embedding_table.dtype),
        grid_spec=grid_spec,
        compiler_params=pltpu.CompilerParams(
            # Disjoint output blocks per step -> safe to split across v7x's
            # two TensorCores; neutral on v5e/v6e.
            dimension_semantics=("parallel",)),
        cost_estimate=cost,
    )(labels_p, table_p)

    return out[:n, :hidden]


def reference(labels, embedding_table, *, num_classes, dropout_prob, train,
              rng=None, force_drop_ids=None):
    labels = labels.astype(jnp.int32)
    labels = _apply_token_drop(labels, num_classes, dropout_prob, train, rng,
                               force_drop_ids)
    return embedding_table[labels]


if __name__ == "__main__":
    num_classes = 10
    hidden_size = 32
    dropout_prob = 0.1
    n = 8

    key = jax.random.PRNGKey(0)
    k_table, k_labels, k_drop = jax.random.split(key, 3)

    # nn.Embedding(num_classes + 1, hidden_size) weights (dropout_prob > 0
    # adds the classifier-free-guidance "null" row).
    table = jax.random.normal(k_table, (num_classes + 1, hidden_size),
                              jnp.float32) * 0.02
    labels = jax.random.randint(k_labels, (n,), 0, num_classes, jnp.int32)

    # Case 1: training with random label dropout (same rng drives the kernel
    # wrapper and the reference, so drop decisions match exactly).
    out_train = label_embedder(labels, table, num_classes=num_classes,
                               dropout_prob=dropout_prob, train=True,
                               rng=k_drop)
    out_train = jax.block_until_ready(out_train)
    ref_train = reference(labels, table, num_classes=num_classes,
                          dropout_prob=dropout_prob, train=True, rng=k_drop)
    assert out_train.shape == (n, hidden_size)
    assert jnp.array_equal(out_train, ref_train)

    # Case 2: forced drop ids (deterministic CFG path).
    force = jnp.array([1, 0, 0, 1, 0, 0, 0, 1], jnp.int32)
    out_force = label_embedder(labels, table, num_classes=num_classes,
                               dropout_prob=dropout_prob, train=False,
                               force_drop_ids=force)
    out_force = jax.block_until_ready(out_force)
    ref_force = reference(labels, table, num_classes=num_classes,
                          dropout_prob=dropout_prob, train=False,
                          force_drop_ids=force)
    assert jnp.array_equal(out_force, ref_force)

    # Case 3: eval with no dropout -- plain embedding lookup.
    out_eval = label_embedder(labels, table, num_classes=num_classes,
                              dropout_prob=dropout_prob, train=False)
    out_eval = jax.block_until_ready(out_eval)
    assert jnp.array_equal(out_eval, table[labels])

    print("KERNEL_OK")
</pallas_src>

<mosaic_0001>
module attributes {stable_mosaic.version = 11 : i64} {
  func.func @_gather_block_kernel(%arg0: i32, %arg1: memref<8xi32, #tpu.memory_space<smem>>, %arg2: memref<16x128xf32, #tpu.memory_space<vmem>>, %arg3: memref<8x128xf32, #tpu.memory_space<vmem>>) attributes {dimension_semantics = [#tpu.dimension_semantics<parallel>], iteration_bounds = array<i64: 1>, scalar_prefetch = 1 : i64, scratch_operands = 0 : i64, tpu.core_type = #tpu.core_type<tc>, window_params = [{pipeline_mode = #tpu.pipeline_mode<synchronous>, transform_indices = @transform_0, window_bounds = array<i64: 16, 128>}, {transform_indices = @transform_1, window_bounds = array<i64: 8, 128>}]} {
    %c0_i32 = arith.constant 0 : i32
    %c8_i32 = arith.constant 8 : i32
    %0 = arith.muli %arg0, %c8_i32 : i32
    %1 = arith.addi %0, %c0_i32 : i32
    %2 = arith.index_cast %1 : i32 to index
    %3 = memref.load %arg1[%2] : memref<8xi32, #tpu.memory_space<smem>>
    %4 = arith.index_cast %3 : i32 to index
    %c0 = arith.constant 0 : index
    %5 = vector.load %arg2[%4, %c0] : memref<16x128xf32, #tpu.memory_space<vmem>>, vector<1x128xf32>
    %6 = arith.index_cast %c0_i32 : i32 to index
    %c0_0 = arith.constant 0 : index
    %7 = vector.load %arg3[%6, %c0_0] : memref<8x128xf32, #tpu.memory_space<vmem>>, vector<1x128xf32>
    tpu.vector_store %arg3[%6, %c0_0], %5 {strides = array<i32>} : memref<8x128xf32, #tpu.memory_space<vmem>>, vector<1x128xf32>,
    %c1_i32 = arith.constant 1 : i32
    %c8_i32_1 = arith.constant 8 : i32
    %8 = arith.muli %arg0, %c8_i32_1 : i32
    %9 = arith.addi %8, %c1_i32 : i32
    %10 = arith.index_cast %9 : i32 to index
    %11 = memref.load %arg1[%10] : memref<8xi32, #tpu.memory_space<smem>>
    %12 = arith.index_cast %11 : i32 to index
    %c0_2 = arith.constant 0 : index
    %13 = vector.load %arg2[%12, %c0_2] : memref<16x128xf32, #tpu.memory_space<vmem>>, vector<1x128xf32>
    %14 = arith.index_cast %c1_i32 : i32 to index
    %c0_3 = arith.constant 0 : index
    %15 = vector.load %arg3[%14, %c0_3] : memref<8x128xf32, #tpu.memory_space<vmem>>, vector<1x128xf32>
    tpu.vector_store %arg3[%14, %c0_3], %13 {strides = array<i32>} : memref<8x128xf32, #tpu.memory_space<vmem>>, vector<1x128xf32>,
    %c2_i32 = arith.constant 2 : i32
    %c8_i32_4 = arith.constant 8 : i32
    %16 = arith.muli %arg0, %c8_i32_4 : i32
    %17 = arith.addi %16, %c2_i32 : i32
    %18 = arith.index_cast %17 : i32 to index
    %19 = memref.load %arg1[%18] : memref<8xi32, #tpu.memory_space<smem>>
    %20 = arith.index_cast %19 : i32 to index
    %c0_5 = arith.constant 0 : index
    %21 = vector.load %arg2[%20, %c0_5] : memref<16x128xf32, #tpu.memory_space<vmem>>, vector<1x128xf32>
    %22 = arith.index_cast %c2_i32 : i32 to index
    %c0_6 = arith.constant 0 : index
    %23 = vector.load %arg3[%22, %c0_6] : memref<8x128xf32, #tpu.memory_space<vmem>>, vector<1x128xf32>
    tpu.vector_store %arg3[%22, %c0_6], %21 {strides = array<i32>} : memref<8x128xf32, #tpu.memory_space<vmem>>, vector<1x128xf32>,
    %c3_i32 = arith.constant 3 : i32
    %c8_i32_7 = arith.constant 8 : i32
    %24 = arith.muli %arg0, %c8_i32_7 : i32
    %25 = arith.addi %24, %c3_i32 : i32
    %26 = arith.index_cast %25 : i32 to index
    %27 = memref.load %arg1[%26] : memref<8xi32, #tpu.memory_space<smem>>
    %28 = arith.index_cast %27 : i32 to index
    %c0_8 = arith.constant 0 : index
    %29 = vector.load %arg2[%28, %c0_8] : memref<16x128xf32, #tpu.memory_space<vmem>>, vector<1x128xf32>
    %30 = arith.index_cast %c3_i32 : i32 to index
    %c0_9 = arith.constant 0 : index
    %31 = vector.load %arg3[%30, %c0_9] : memref<8x128xf32, #tpu.memory_space<vmem>>, vector<1x128xf32>
    tpu.vector_store %arg3[%30, %c0_9], %29 {strides = array<i32>} : memref<8x128xf32, #tpu.memory_space<vmem>>, vector<1x128xf32>,
    %c4_i32 = arith.constant 4 : i32
    %c8_i32_10 = arith.constant 8 : i32
    %32 = arith.muli %arg0, %c8_i32_10 : i32
    %33 = arith.addi %32, %c4_i32 : i32
    %34 = arith.index_cast %33 : i32 to index
    %35 = memref.load %arg1[%34] : memref<8xi32, #tpu.memory_space<smem>>
    %36 = arith.index_cast %35 : i32 to index
    %c0_11 = arith.constant 0 : index
    %37 = vector.load %arg2[%36, %c0_11] : memref<16x128xf32, #tpu.memory_space<vmem>>, vector<1x128xf32>
    %38 = arith.index_cast %c4_i32 : i32 to index
    %c0_12 = arith.constant 0 : index
    %39 = vector.load %arg3[%38, %c0_12] : memref<8x128xf32, #tpu.memory_space<vmem>>, vector<1x128xf32>
    tpu.vector_store %arg3[%38, %c0_12], %37 {strides = array<i32>} : memref<8x128xf32, #tpu.memory_space<vmem>>, vector<1x128xf32>,
    %c5_i32 = arith.constant 5 : i32
    %c8_i32_13 = arith.constant 8 : i32
    %40 = arith.muli %arg0, %c8_i32_13 : i32
    %41 = arith.addi %40, %c5_i32 : i32
    %42 = arith.index_cast %41 : i32 to index
    %43 = memref.load %arg1[%42] : memref<8xi32, #tpu.memory_space<smem>>
    %44 = arith.index_cast %43 : i32 to index
    %c0_14 = arith.constant 0 : index
    %45 = vector.load %arg2[%44, %c0_14] : memref<16x128xf32, #tpu.memory_space<vmem>>, vector<1x128xf32>
    %46 = arith.index_cast %c5_i32 : i32 to index
    %c0_15 = arith.constant 0 : index
    %47 = vector.load %arg3[%46, %c0_15] : memref<8x128xf32, #tpu.memory_space<vmem>>, vector<1x128xf32>
    tpu.vector_store %arg3[%46, %c0_15], %45 {strides = array<i32>} : memref<8x128xf32, #tpu.memory_space<vmem>>, vector<1x128xf32>,
    %c6_i32 = arith.constant 6 : i32
    %c8_i32_16 = arith.constant 8 : i32
    %48 = arith.muli %arg0, %c8_i32_16 : i32
    %49 = arith.addi %48, %c6_i32 : i32
    %50 = arith.index_cast %49 : i32 to index
    %51 = memref.load %arg1[%50] : memref<8xi32, #tpu.memory_space<smem>>
    %52 = arith.index_cast %51 : i32 to index
    %c0_17 = arith.constant 0 : index
    %53 = vector.load %arg2[%52, %c0_17] : memref<16x128xf32, #tpu.memory_space<vmem>>, vector<1x128xf32>
    %54 = arith.index_cast %c6_i32 : i32 to index
    %c0_18 = arith.constant 0 : index
    %55 = vector.load %arg3[%54, %c0_18] : memref<8x128xf32, #tpu.memory_space<vmem>>, vector<1x128xf32>
    tpu.vector_store %arg3[%54, %c0_18], %53 {strides = array<i32>} : memref<8x128xf32, #tpu.memory_space<vmem>>, vector<1x128xf32>,
    %c7_i32 = arith.constant 7 : i32
    %c8_i32_19 = arith.constant 8 : i32
    %56 = arith.muli %arg0, %c8_i32_19 : i32
    %57 = arith.addi %56, %c7_i32 : i32
    %58 = arith.index_cast %57 : i32 to index
    %59 = memref.load %arg1[%58] : memref<8xi32, #tpu.memory_space<smem>>
    %60 = arith.index_cast %59 : i32 to index
    %c0_20 = arith.constant 0 : index
    %61 = vector.load %arg2[%60, %c0_20] : memref<16x128xf32, #tpu.memory_space<vmem>>, vector<1x128xf32>
    %62 = arith.index_cast %c7_i32 : i32 to index
    %c0_21 = arith.constant 0 : index
    %63 = vector.load %arg3[%62, %c0_21] : memref<8x128xf32, #tpu.memory_space<vmem>>, vector<1x128xf32>
    tpu.vector_store %arg3[%62, %c0_21], %61 {strides = array<i32>} : memref<8x128xf32, #tpu.memory_space<vmem>>, vector<1x128xf32>,
    %c8_i32_22 = arith.constant 8 : i32
    return
  }
  func.func @transform_0(%arg0: i32, %arg1: memref<8xi32, #tpu.memory_space<smem>>) -> (i32, i32) {
    %c0_i32 = arith.constant 0 : i32
    %c0_i32_0 = arith.constant 0 : i32
    %c0_i32_1 = arith.constant 0 : i32
    return %c0_i32, %c0_i32_0 : i32, i32
  }
  func.func @transform_1(%arg0: i32, %arg1: memref<8xi32, #tpu.memory_space<smem>>) -> (i32, i32) {
    %c0_i32 = arith.constant 0 : i32
    %c0_i32_0 = arith.constant 0 : i32
    return %arg0, %c0_i32 : i32, i32
  }
}

</mosaic_0001>

<llo_original>
// kernel: tpu_custom_call.1
$region0: #{tpu_custom_call.1}
  #allocation0 [shape = 'u32[]', space=smem, size = 0x4, offset = 0x4, fixed_abs, tag = 'smem constant byte address 0x4 - core index']
  #allocation1 [shape = 'u32[144,128]{1,0:T(1,128)}', space=vmem, size = 0x12000, scoped, tag = 'internal scratch']
  #allocation2 [shape = 's32[1]{0}', space=sflag, size = 0x4, scoped, tag = 'scoped memory for tpu_custom_call.1']
  #allocation3 [shape = 'u8[512]{0}', space=smem, size = 0x200, scoped, tag = 'prefetched SMEM operand 0']
  %s0 = inlined_call_operand.hbm [shape: s32[8], index: 0, kind: input, shape index: {}]
  %s1 = inlined_call_operand.hbm [shape: f32[16,128], index: 1, kind: input, shape index: {}]
  %s2 = inlined_call_operand.hbm [shape: f32[8,128], index: 2, kind: output, shape index: {}]
  %s3 = sld [smem:[#allocation0]]
  $region18: #{tpu_custom_call.1} parent=0
    _
  %s5 = ssub.s32 1, %s3
  %s6 = scalar_select 0, %s5, %s3
  %8 = dma.hbm_to_smem %s0, 16, [#allocation3], [#allocation2]
  %9 = dma.done [#allocation2], 16
  %10 = sfence
  $region1: #{tpu_custom_call.1} parent=0
    #allocation4 [shape = 'u8[8192]{0}', space=vmem, size = 0x2000, scoped, tag = 'input window, operand 1, single buffered']
    #allocation5 [shape = 's32[1]{0}', space=sflag, size = 0x4, scoped, tag = 'scoped memory for tpu_custom_call.1']
    #allocation6 [shape = 's32[1]{0}', space=sflag, size = 0x4, scoped, tag = 'scoped memory for tpu_custom_call.1']
    #allocation7 [shape = 'u8[4096]{0}', space=vmem, size = 0x1000, scoped, tag = 'output window, operand 0, single buffered']
    %11 = vsyncpa [#allocation5], 0
    %12 = vsyncpa [#allocation6], 0
    // Predicated region
    $region2: #{tpu_custom_call.1} parent=1 // pred_check
      _
    $region3: #{tpu_custom_call.1} parent=1 // pred_check_branch
      %14 = sbr.rel (0) target = $region5
    $region4: #{tpu_custom_call.1} parent=1 // pred_region
      %s16 = ssub.s32 256, 256
      %17 = vsyncadd [#allocation5], %s16
      %s18 = sshll.u32 [#allocation4], 4
      %s19 = int_to_ptr.vmem [resolvable:$true] %s18
      %24 = dma.hbm_to_vmem [thread:$0]  %s1, 256, %s19, [#allocation5], 128, 128, 8
    $region5: #{tpu_custom_call.1} parent=1 // pred_fallthru
      _
    // Predicated region
    $region6: #{tpu_custom_call.1} parent=1 // pred_check
      _
    $region7: #{tpu_custom_call.1} parent=1 // pred_check_branch
      %26 = sbr.rel (0) target = $region9
    $region8: #{tpu_custom_call.1} parent=1 // pred_region
      %27 = dma.done [#allocation5], 256
    $region9: #{tpu_custom_call.1} parent=1 // pred_fallthru
      _
    %s28 = smul.u32 0, 8
    %s29 = sld [smem:[#allocation3 + %s28]]
    %s30 = scalar_lea.vmem [#allocation4], %s29
    %v31 = vld [vmem:[%s30] sm:$0x1]
    %32 = vst [vmem:[#allocation7] sm:$0x1] %v31
    %s33 = sadd.s32 %s28, 1
    %s34 = sld [smem:[#allocation3 + %s33]]
    %s35 = scalar_lea.vmem [#allocation4], %s34
    %v36 = vld [vmem:[%s35] sm:$0x1]
    %37 = vst [vmem:[#allocation7 + $0x1] sm:$0x1] %v36
    %s38 = sadd.s32 %s28, 2
    %s39 = sld [smem:[#allocation3 + %s38]]
    %s40 = scalar_lea.vmem [#allocation4], %s39
    %v41 = vld [vmem:[%s40] sm:$0x1]
    %42 = vst [vmem:[#allocation7 + $0x2] sm:$0x1] %v41
    %s43 = sadd.s32 %s28, 3
    %s44 = sld [smem:[#allocation3 + %s43]]
    %s45 = scalar_lea.vmem [#allocation4], %s44
    %v46 = vld [vmem:[%s45] sm:$0x1]
    %47 = vst [vmem:[#allocation7 + $0x3] sm:$0x1] %v46
    %s48 = sadd.s32 %s28, 4
    %s49 = sld [smem:[#allocation3 + %s48]]
    %s50 = scalar_lea.vmem [#allocation4], %s49
    %v51 = vld [vmem:[%s50] sm:$0x1]
    %52 = vst [vmem:[#allocation7 + $0x4] sm:$0x1] %v51
    %s53 = sadd.s32 %s28, 5
    %s54 = sld [smem:[#allocation3 + %s53]]
    %s55 = scalar_lea.vmem [#allocation4], %s54
    %v56 = vld [vmem:[%s55] sm:$0x1]
    %57 = vst [vmem:[#allocation7 + $0x5] sm:$0x1] %v56
    %s58 = sadd.s32 %s28, 6
    %s59 = sld [smem:[#allocation3 + %s58]]
    %s60 = scalar_lea.vmem [#allocation4], %s59
    %v61 = vld [vmem:[%s60] sm:$0x1]
    %62 = vst [vmem:[#allocation7 + $0x6] sm:$0x1] %v61
    %s63 = sadd.s32 %s28, 7
    %s64 = sld [smem:[#allocation3 + %s63]]
    %s65 = scalar_lea.vmem [#allocation4], %s64
    %v66 = vld [vmem:[%s65] sm:$0x1]
    %67 = vst [vmem:[#allocation7 + $0x7] sm:$0x1] %v66
    // Predicated region
    $region10: #{tpu_custom_call.1} parent=1 // pred_check
      _
    $region11: #{tpu_custom_call.1} parent=1 // pred_check_branch
      %69 = sbr.rel (0) target = $region13
    $region12: #{tpu_custom_call.1} parent=1 // pred_region
      %s71 = ssub.s32 128, 128
      %72 = vsyncadd [#allocation6], %s71
      %s74 = sshll.u32 [#allocation7], 4
      %s75 = int_to_ptr.vmem [resolvable:$true] %s74
      %77 = dma.vmem_to_hbm [thread:$0]  %s75, 128, %s2, [#allocation6]
    $region13: #{tpu_custom_call.1} parent=1 // pred_fallthru
      _
    // Predicated region
    $region14: #{tpu_custom_call.1} parent=1 // pred_check
      _
    $region15: #{tpu_custom_call.1} parent=1 // pred_check_branch
      %79 = sbr.rel (0) target = $region17
    $region16: #{tpu_custom_call.1} parent=1 // pred_region
      %80 = dma.done [#allocation6], 128
    $region17: #{tpu_custom_call.1} parent=1 // pred_fallthru
      _
    %81 = vsyncpa [#allocation5], 1
    %82 = vsyncpa [#allocation6], 1

</llo_original>
